<compile_context>
chip_gen: v5e
topology: v5e:2x2
jax: 0.10.0
libtpu: 0.0.40
codegen_flags: <defaults>
</compile_context>

<pallas_src>
import functools

import jax
import jax.numpy as jnp
from jax.experimental import pallas as pl
from jax.experimental.pallas import tpu as pltpu


def _round_up(n, m):
    return ((n + m - 1) // m) * m


def _default_use_bf16():
    """bf16 VPU/EUP path exists on v6e / v7x; not on v5e and earlier."""
    try:
        kind = jax.devices()[0].device_kind.lower()
    except Exception:
        return False
    return ("v6" in kind) or ("v7" in kind) or ("7x" in kind)


# --------------------------------------------------------------------------
# Kernel
# --------------------------------------------------------------------------
def _critic_kernel(slab_ref, xt_ref, o_ref, *, hidden, num_inputs, use_bf16):
    """slab_ref: (2H, H) packed params; xt_ref: (num_inputs, TB); o_ref: (1, TB)."""
    H, NI = hidden, num_inputs

    # Static slices of the resident parameter slab (ref views -> cheap loads).
    w1 = slab_ref[0:H, 0:NI]              # (H, NI)  PyTorch Linear1 weight (out, in)
    b1 = slab_ref[0:H, NI:NI + 1]         # (H, 1)
    b2 = slab_ref[0:H, NI + 1:NI + 2]     # (H, 1)
    w3 = slab_ref[0:H, NI + 2:NI + 3]     # (H, 1)   Linear3 weight as a column
    b3 = slab_ref[0:1, NI + 3:NI + 4]     # (1, 1)
    w2 = slab_ref[H:2 * H, :]             # (H, H)   PyTorch Linear2 weight (out, in)

    xt = xt_ref[...]                      # (NI, TB): batch lives on the lane axis

    if use_bf16:
        # v6e/v7x: bf16 MXU operands + bf16 tanh (EUP), f32 accumulation.
        cdt = jnp.bfloat16
        h1 = jnp.dot(w1.astype(cdt), xt.astype(cdt),
                     preferred_element_type=jnp.float32) + b1
        h1 = jnp.tanh(h1.astype(cdt))                       # (H, TB) bf16
        h2 = jnp.dot(w2.astype(cdt), h1,
                     preferred_element_type=jnp.float32) + b2
        h2 = jnp.tanh(h2.astype(cdt))                       # (H, TB) bf16
        # Final layer stays f32: VPU multiply + sublane reduce + bias.
        v = jnp.sum(h2.astype(jnp.float32) * w3, axis=0, keepdims=True) + b3
    else:
        # v5e (and fallback): pure f32 path.
        h1 = jnp.tanh(jnp.dot(w1, xt, preferred_element_type=jnp.float32) + b1)
        h2 = jnp.tanh(jnp.dot(w2, h1, preferred_element_type=jnp.float32) + b2)
        v = jnp.sum(h2 * w3, axis=0, keepdims=True) + b3

    o_ref[...] = v.astype(o_ref.dtype)


# --------------------------------------------------------------------------
# Tiling helper
# --------------------------------------------------------------------------
def _pick_tile(batch, block_b):
    """Choose the batch (lane) tile.

    - tile is a multiple of 128 (or the single lane-padded tile for tiny B)
    - tile is capped by block_b (amortizes per-grid-step overhead)
    - when the padded batch is >= 256 the grid gets >= 2 steps, so v7x's two
      TensorCores both receive work under dimension_semantics=("parallel",).
    """
    b128 = _round_up(batch, 128)
    if b128 >= 256:
        tb = min(block_b, _round_up(pl.cdiv(b128, 2), 128))
    else:
        tb = b128
    b_pad = _round_up(batch, tb)
    return tb, b_pad


# --------------------------------------------------------------------------
# Wrappers
# --------------------------------------------------------------------------
def critic_forward_xt(xt, slab, *, batch, hidden, num_inputs, block_b=4096,
                      use_bf16=None):
    """xt: (num_inputs, B_pad) f32 with batch on the lane axis (already padded).

    This entry point avoids the wrapper-side transpose+pad HBM pass when the
    producer stores observations batch-on-lanes.
    """
    if use_bf16 is None:
        use_bf16 = _default_use_bf16()

    tb, b_pad = _pick_tile(batch, block_b)
    assert xt.shape[0] == num_inputs and xt.shape[1] >= b_pad
    grid = b_pad // tb

    R, C = slab.shape
    kernel = functools.partial(
        _critic_kernel, hidden=hidden, num_inputs=num_inputs, use_bf16=use_bf16)

    out = pl.pallas_call(
        kernel,
        out_shape=jax.ShapeDtypeStruct((1, b_pad), jnp.float32),
        grid_spec=pltpu.PrefetchScalarGridSpec(
            num_scalar_prefetch=0,
            grid=(grid,),
            in_specs=[
                # Parameter slab: same block every step -> VMEM-resident.
                pl.BlockSpec((R, C), lambda i: (0, 0)),
                # Activations: tiled along the batch (lane) axis.
                pl.BlockSpec((num_inputs, tb), lambda i: (0, i)),
            ],
            out_specs=pl.BlockSpec((1, tb), lambda i: (0, i)),
        ),
        compiler_params=pltpu.CompilerParams(
            dimension_semantics=("parallel",),
        ),
    )(slab, xt[:, :b_pad])

    return out[0, :batch].reshape(batch, 1)


def critic_forward(x, slab, *, hidden, num_inputs, block_b=4096, use_bf16=None):
    """x: (B, num_inputs) f32 (PyTorch layout), slab: packed params -> (B, 1) f32."""
    B = x.shape[0]
    assert x.shape[1] == num_inputs

    _, b_pad = _pick_tile(B, block_b)
    # Batch on lanes: transpose + lane-pad once (skip this path entirely by
    # calling critic_forward_xt when observations are already (NI, B_pad)).
    xt = jnp.pad(x.astype(jnp.float32).T, ((0, 0), (0, b_pad - B)))
    return critic_forward_xt(xt, slab, batch=B, hidden=hidden,
                             num_inputs=num_inputs, block_b=block_b,
                             use_bf16=use_bf16)


critic_forward_jit = jax.jit(
    critic_forward,
    static_argnames=("hidden", "num_inputs", "block_b", "use_bf16"),
)
critic_forward_xt_jit = jax.jit(
    critic_forward_xt,
    static_argnames=("batch", "hidden", "num_inputs", "block_b", "use_bf16"),
)


# --------------------------------------------------------------------------
# Parameter init / packing / pure-JAX reference
# --------------------------------------------------------------------------
def init_params(key, num_inputs, hidden_size):
    """PyTorch-Linear-style init, weights stored in PyTorch (out, in) layout."""
    ks = jax.random.split(key, 6)

    def lin(kw, kb, fan_in, fan_out):
        bound = float(fan_in) ** -0.5
        w = jax.random.uniform(kw, (fan_out, fan_in), jnp.float32, -bound, bound)
        b = jax.random.uniform(kb, (fan_out,), jnp.float32, -bound, bound)
        return w, b

    W1, b1 = lin(ks[0], ks[1], num_inputs, hidden_size)
    W2, b2 = lin(ks[2], ks[3], hidden_size, hidden_size)
    W3, b3 = lin(ks[4], ks[5], hidden_size, 1)
    return {"W1": W1, "b1": b1, "W2": W2, "b2": b2, "W3": W3, "b3": b3}


def pack_params(p, hidden, num_inputs):
    """Pack all 6 tensors into one (2H, H) f32 slab (a single DMA)."""
    C = hidden
    assert num_inputs + 4 <= C, "slab layout needs num_inputs + 4 <= hidden"
    slab = jnp.zeros((2 * hidden, C), jnp.float32)
    slab = slab.at[:hidden, :num_inputs].set(p["W1"])          # (H, NI)
    slab = slab.at[:hidden, num_inputs].set(p["b1"])           # col NI
    slab = slab.at[:hidden, num_inputs + 1].set(p["b2"])       # col NI+1
    slab = slab.at[:hidden, num_inputs + 2].set(p["W3"][0])    # col NI+2 (W3 column)
    slab = slab.at[0, num_inputs + 3].set(p["b3"][0])          # scalar at (0, NI+3)
    slab = slab.at[hidden:, :].set(p["W2"])                    # (H, H)
    return slab


def critic_reference(x, p):
    h1 = jnp.tanh(x @ p["W1"].T + p["b1"])
    h2 = jnp.tanh(h1 @ p["W2"].T + p["b2"])
    return h2 @ p["W3"].T + p["b3"]


# --------------------------------------------------------------------------
# Demo / self-check
# --------------------------------------------------------------------------
if __name__ == "__main__":
    # CartPole-v0: observation dim = 4 (num_actions = 2 is unused by Critic).
    num_inputs = 4
    hidden_size = 32
    batch = 8

    key = jax.random.PRNGKey(0)
    k_x, k_p, k_x2 = jax.random.split(key, 3)

    x = jax.random.normal(k_x, (batch, num_inputs), dtype=jnp.float32)
    params = init_params(k_p, num_inputs, hidden_size)
    slab = pack_params(params, hidden_size, num_inputs)

    auto_bf16 = _default_use_bf16()

    # --- Small-batch path, pure-f32 kernel, tight tolerance -----------------
    value = critic_forward_jit(x, slab, hidden=hidden_size,
                               num_inputs=num_inputs, use_bf16=False)
    value = jax.block_until_ready(value)
    ref = critic_reference(x, params)
    assert value.shape == (batch, 1)
    assert jnp.allclose(value, ref, atol=1e-4, rtol=1e-4), \
        "mismatch vs reference (small batch, f32)"

    # --- Small-batch path, chip-default precision ----------------------------
    value_a = critic_forward_jit(x, slab, hidden=hidden_size,
                                 num_inputs=num_inputs)
    value_a = jax.block_until_ready(value_a)
    tol = 3e-2 if auto_bf16 else 1e-4
    assert jnp.allclose(value_a, ref, atol=tol, rtol=tol), \
        "mismatch vs reference (small batch, auto precision)"

    # --- Large-batch path: multi-step grid (>=2 steps -> both v7x TCs) ------
    big_b = 1000
    x2 = jax.random.normal(k_x2, (big_b, num_inputs), dtype=jnp.float32)
    value2 = critic_forward_jit(x2, slab, hidden=hidden_size,
                                num_inputs=num_inputs, use_bf16=False)
    value2 = jax.block_until_ready(value2)
    ref2 = critic_reference(x2, params)
    assert value2.shape == (big_b, 1)
    assert jnp.allclose(value2, ref2, atol=1e-4, rtol=1e-4), \
        "mismatch vs reference (large batch, f32)"

    # --- Pre-transposed (batch-on-lanes) entry point: no wrapper transpose ---
    _, b_pad2 = _pick_tile(big_b, 4096)
    xt2 = jnp.pad(x2.T, ((0, 0), (0, b_pad2 - big_b)))  # producer-side layout
    value3 = critic_forward_xt_jit(xt2, slab, batch=big_b, hidden=hidden_size,
                                   num_inputs=num_inputs, use_bf16=False)
    value3 = jax.block_until_ready(value3)
    assert jnp.allclose(value3, ref2, atol=1e-4, rtol=1e-4), \
        "mismatch vs reference (xt entry point)"

    print("KERNEL_OK")
</pallas_src>

<mosaic_0001>
module attributes {stable_mosaic.version = 11 : i64} {
  func.func @_critic_kernel(%arg0: i32, %arg1: memref<64x32xf32, #tpu.memory_space<vmem>>, %arg2: memref<4x128xf32, #tpu.memory_space<vmem>>, %arg3: memref<1x128xf32, #tpu.memory_space<vmem>>) attributes {dimension_semantics = [#tpu.dimension_semantics<parallel>], iteration_bounds = array<i64: 1>, scalar_prefetch = 0 : i64, scratch_operands = 0 : i64, tpu.core_type = #tpu.core_type<tc>, window_params = [{pipeline_mode = #tpu.pipeline_mode<synchronous>, transform_indices = @transform_0, window_bounds = array<i64: 64, 32>}, {transform_indices = @transform_1, window_bounds = array<i64: 4, 128>}, {transform_indices = @transform_2, window_bounds = array<i64: 1, 128>}]} {
    %c0 = arith.constant 0 : index
    %c0_0 = arith.constant 0 : index
    %0 = vector.load %arg1[%c0, %c0_0] : memref<64x32xf32, #tpu.memory_space<vmem>>, vector<32x4xf32>
    %c0_1 = arith.constant 0 : index
    %c4 = arith.constant 4 : index
    %1 = vector.load %arg1[%c0_1, %c4] : memref<64x32xf32, #tpu.memory_space<vmem>>, vector<32x1xf32>
    %c0_2 = arith.constant 0 : index
    %c5 = arith.constant 5 : index
    %2 = vector.load %arg1[%c0_2, %c5] : memref<64x32xf32, #tpu.memory_space<vmem>>, vector<32x1xf32>
    %c0_3 = arith.constant 0 : index
    %c6 = arith.constant 6 : index
    %3 = vector.load %arg1[%c0_3, %c6] : memref<64x32xf32, #tpu.memory_space<vmem>>, vector<32x1xf32>
    %c0_4 = arith.constant 0 : index
    %c7 = arith.constant 7 : index
    %4 = vector.load %arg1[%c0_4, %c7] : memref<64x32xf32, #tpu.memory_space<vmem>>, vector<1x1xf32>
    %c32 = arith.constant 32 : index
    %c0_5 = arith.constant 0 : index
    %5 = vector.load %arg1[%c32, %c0_5] : memref<64x32xf32, #tpu.memory_space<vmem>>, vector<32x32xf32>
    %c0_6 = arith.constant 0 : index
    %c0_7 = arith.constant 0 : index
    %6 = vector.load %arg2[%c0_6, %c0_7] : memref<4x128xf32, #tpu.memory_space<vmem>>, vector<4x128xf32>
    %cst = arith.constant dense<0.000000e+00> : vector<32x128xf32>
    %7 = tpu.matmul %0, %6, %cst {dimension_numbers = #tpu.dot_dimension_numbers<[1], [0], [0], [1], [0, 0, 1, 1], [], []>} : vector<32x4xf32>, vector<4x128xf32>, vector<32x128xf32> -> vector<32x128xf32>
    %8 = vector.broadcast %1 : vector<32x1xf32> to vector<32x128xf32>
    %9 = arith.addf %7, %8 : vector<32x128xf32>
    %10 = math.tanh %9 : vector<32x128xf32>
    %cst_8 = arith.constant dense<0.000000e+00> : vector<32x128xf32>
    %11 = tpu.matmul %5, %10, %cst_8 {dimension_numbers = #tpu.dot_dimension_numbers<[1], [0], [0], [1], [0, 0, 1, 1], [], []>} : vector<32x32xf32>, vector<32x128xf32>, vector<32x128xf32> -> vector<32x128xf32>
    %12 = vector.broadcast %2 : vector<32x1xf32> to vector<32x128xf32>
    %13 = arith.addf %11, %12 : vector<32x128xf32>
    %14 = math.tanh %13 : vector<32x128xf32>
    %15 = vector.broadcast %3 : vector<32x1xf32> to vector<32x128xf32>
    %16 = arith.mulf %14, %15 : vector<32x128xf32>
    %cst_9 = arith.constant dense<0.000000e+00> : vector<128xf32>
    %17 = vector.multi_reduction <add>, %16, %cst_9 [0] : vector<32x128xf32> to vector<128xf32>
    %18 = vector.shape_cast %17 : vector<128xf32> to vector<1x128xf32>
    %19 = vector.broadcast %4 : vector<1x1xf32> to vector<1x128xf32>
    %20 = arith.addf %18, %19 : vector<1x128xf32>
    %c0_10 = arith.constant 0 : index
    %c0_11 = arith.constant 0 : index
    %21 = vector.load %arg3[%c0_10, %c0_11] : memref<1x128xf32, #tpu.memory_space<vmem>>, vector<1x128xf32>
    tpu.vector_store %arg3[%c0_10, %c0_11], %20 {strides = array<i32>} : memref<1x128xf32, #tpu.memory_space<vmem>>, vector<1x128xf32>,
    return
  }
  func.func @transform_0(%arg0: i32) -> (i32, i32) {
    %c0_i32 = arith.constant 0 : i32
    %c0_i32_0 = arith.constant 0 : i32
    %c0_i32_1 = arith.constant 0 : i32
    return %c0_i32, %c0_i32_0 : i32, i32
  }
  func.func @transform_1(%arg0: i32) -> (i32, i32) {
    %c0_i32 = arith.constant 0 : i32
    %c0_i32_0 = arith.constant 0 : i32
    return %c0_i32, %arg0 : i32, i32
  }
  func.func @transform_2(%arg0: i32) -> (i32, i32) {
    %c0_i32 = arith.constant 0 : i32
    %c0_i32_0 = arith.constant 0 : i32
    return %c0_i32, %arg0 : i32, i32
  }
}

</mosaic_0001>

<llo_original>
// kernel: critic_forward.1
$region0: #{critic_forward.1}
  #allocation0 [shape = 'u32[]', space=smem, size = 0x4, offset = 0x4, fixed_abs, tag = 'smem constant byte address 0x4 - core index']
  #allocation1 [shape = 'u32[72,128]{1,0:T(1,128)}', space=vmem, size = 0x9000, scoped, tag = 'internal scratch']
  %s0 = inlined_call_operand.vmem [shape: f32[64,32], index: 0, kind: input, shape index: {}]
  %s1 = inlined_call_operand.vmem [shape: f32[4,128], index: 1, kind: input, shape index: {}]
  %s2 = inlined_call_operand.vmem [shape: f32[1,128], index: 2, kind: output, shape index: {}]
  %s3 = sld [smem:[#allocation0]]
  $region18: #{critic_forward.1} parent=0
    _
  %s5 = ssub.s32 1, %s3
  %s6 = scalar_select 0, %s5, %s3
  // Predicated region
  $region2: #{critic_forward.1} parent=0 // pred_check
    _
  $region3: #{critic_forward.1} parent=0 // pred_check_branch
    %8 = sbr.rel (0) target = $region5
  $region4: #{critic_forward.1} parent=0 // pred_region
    _
  $region5: #{critic_forward.1} parent=0 // pred_fallthru
    _
  // Predicated region
  $region6: #{critic_forward.1} parent=0 // pred_check
    _
  $region7: #{critic_forward.1} parent=0 // pred_check_branch
    %10 = sbr.rel (0) target = $region9
  $region8: #{critic_forward.1} parent=0 // pred_region
    _
  $region9: #{critic_forward.1} parent=0 // pred_fallthru
    _
  %v11 = vld [vmem:[%s0] sm:$0xff]
  %v12 = vld [vmem:[%s0 + $0x8] sm:$0xff]
  %v13 = vld [vmem:[%s0 + $0x10] sm:$0xff]
  %v14 = vld [vmem:[%s0 + $0x18] sm:$0xff]
  %v15 = vld [vmem:[%s0] sm:$0x1]
  %v16 = vld [vmem:[%s0 + $0x20] sm:$0xff]
  %v17 = vld [vmem:[%s0 + $0x28] sm:$0xff]
  %v18 = vld [vmem:[%s0 + $0x30] sm:$0xff]
  %v19 = vld [vmem:[%s0 + $0x38] sm:$0xff]
  %v20 = vld [vmem:[%s1] sm:$0xf]
  %22 = vset.pattern.permute.xlu0 4
  %23 = vperm.xlu0 %22, %v11
  %v24 = vpop.permute.xlu0 %23
  %27 = vset.pattern.permute.xlu0 4
  %28 = vperm.xlu0 %27, %v12
  %v29 = vpop.permute.xlu0 %28
  %32 = vset.pattern.permute.xlu0 4
  %33 = vperm.xlu0 %32, %v13
  %v34 = vpop.permute.xlu0 %33
  %37 = vset.pattern.permute.xlu0 4
  %38 = vperm.xlu0 %37, %v14
  %v39 = vpop.permute.xlu0 %38
  %vm41 = vcmask 31744
  %v42 = vsel %vm41, %v11, 0
  %v44 = vsel %vm41, %v12, 0
  %v46 = vsel %vm41, %v13, 0
  %v48 = vsel %vm41, %v14, 0
  %vm50 = vcmask 1043456
  %v52 = vsel %vm50, %v20, 0
  %54 = vmatpush.msra.mxu0 0.0
  %55 = vmatpush.msra.mxu0 0.0
  %56 = vmatpush.msra.mxu0 0.0
  %57 = vmatpush.msra.mxu0 0.0
  %58 = vmatpush.msra.mxu0 0.0
  %59 = vmatpush.msra.mxu0 0.0
  %60 = vmatpush.msra.mxu0 0.0
  %61 = vmatpush.msra.mxu0 0.0
  %62 = vmatpush.msra.mxu0 0.0
  %63 = vmatpush.msra.mxu0 0.0
  %64 = vmatpush.msra.mxu0 0.0
  %65 = vmatpush.msra.mxu0 0.0
  %66 = vmatpush.msra.mxu0 0.0
  %67 = vmatpush.msra.mxu0 0.0
  %68 = vmatpush.msra.mxu0 0.0
  %69 = vmatpush.msra.mxu0 %v52
  %70 = vmatmul.f32.gmra.mxu0 %v42
  %v71 = vpop.f32.mrf.mxu0
  %v72 = vadd.f32 %v24, %v71
  %73 = vmatmul.f32.gmra.mxu0 %v44
  %v74 = vpop.f32.mrf.mxu0
  %v75 = vadd.f32 %v29, %v74
  %76 = vmatmul.f32.gmra.mxu0 %v46
  %v77 = vpop.f32.mrf.mxu0
  %v78 = vadd.f32 %v34, %v77
  %79 = vmatmul.f32.gmra.mxu0 %v48
  %v80 = vpop.f32.mrf.mxu0
  %v81 = vadd.f32 %v39, %v80
  %82 = vdwg.mxu0
  %v83 = vtanh.pop %v72
  %v84 = vtanh.pop %v75
  %v85 = vtanh.pop %v78
  %v86 = vtanh.pop %v81
  %87 = vset.pattern.permute.xlu0 5
  %88 = vperm.xlu0 %87, %v11
  %v89 = vpop.permute.xlu0 %88
  %91 = vset.pattern.permute.xlu0 5
  %92 = vperm.xlu0 %91, %v12
  %v93 = vpop.permute.xlu0 %92
  %95 = vset.pattern.permute.xlu0 5
  %96 = vperm.xlu0 %95, %v13
  %v97 = vpop.permute.xlu0 %96
  %99 = vset.pattern.permute.xlu0 5
  %100 = vperm.xlu0 %99, %v14
  %v101 = vpop.permute.xlu0 %100
  %vm103 = vcmask 261120
  %v105 = vsel %vm103, %v16, 0
  %v108 = vsel %vm103, %v17, 0
  %v111 = vsel %vm103, %v18, 0
  %v114 = vsel %vm103, %v19, 0
  %116 = vmatpush.msra.mxu0 0.0
  %117 = vmatpush.msra.mxu0 0.0
  %118 = vmatpush.msra.mxu0 0.0
  %119 = vmatpush.msra.mxu0 0.0
  %120 = vmatpush.msra.mxu0 0.0
  %121 = vmatpush.msra.mxu0 0.0
  %122 = vmatpush.msra.mxu0 0.0
  %123 = vmatpush.msra.mxu0 0.0
  %124 = vmatpush.msra.mxu0 0.0
  %125 = vmatpush.msra.mxu0 0.0
  %126 = vmatpush.msra.mxu0 0.0
  %127 = vmatpush.msra.mxu0 0.0
  %128 = vmatpush.msra.mxu0 %v86
  %129 = vmatpush.msra.mxu0 %v85
  %130 = vmatpush.msra.mxu0 %v84
  %131 = vmatpush.msra.mxu0 %v83
  %132 = vmatmul.f32.gmra.mxu0 %v105
  %v133 = vpop.f32.mrf.mxu0
  %v134 = vadd.f32 %v89, %v133
  %135 = vmatmul.f32.gmra.mxu0 %v108
  %v136 = vpop.f32.mrf.mxu0
  %v137 = vadd.f32 %v93, %v136
  %138 = vmatmul.f32.gmra.mxu0 %v111
  %v139 = vpop.f32.mrf.mxu0
  %v140 = vadd.f32 %v97, %v139
  %141 = vmatmul.f32.gmra.mxu0 %v114
  %v142 = vpop.f32.mrf.mxu0
  %v143 = vadd.f32 %v101, %v142
  %144 = vdwg.mxu0
  %v145 = vtanh.pop %v134
  %v146 = vtanh.pop %v137
  %v147 = vtanh.pop %v140
  %v148 = vtanh.pop %v143
  %149 = vset.pattern.permute.xlu0 6
  %150 = vperm.xlu0 %149, %v11
  %v151 = vpop.permute.xlu0 %150
  %153 = vset.pattern.permute.xlu0 6
  %154 = vperm.xlu0 %153, %v12
  %v155 = vpop.permute.xlu0 %154
  %157 = vset.pattern.permute.xlu0 6
  %158 = vperm.xlu0 %157, %v13
  %v159 = vpop.permute.xlu0 %158
  %161 = vset.pattern.permute.xlu0 6
  %162 = vperm.xlu0 %161, %v14
  %v163 = vpop.permute.xlu0 %162
  %v165 = vmul.f32 %v145, %v151
  %v166 = vmul.f32 %v146, %v155
  %v167 = vmul.f32 %v147, %v159
  %v168 = vmul.f32 %v148, %v163
  %v169 = vadd.f32 %v165, %v166
  %v170 = vadd.f32 %v169, %v167
  %v171 = vadd.f32 %v170, %v168
  %v172 = vrot.slane %v171, 4
  %v173 = vadd.f32 %v171, %v172
  %v174 = vrot.slane %v173, 2
  %v175 = vadd.f32 %v173, %v174
  %v176 = vrot.slane %v175, 1
  %v177 = vadd.f32 %v175, %v176
  %179 = vset.pattern.permute.xlu0 7
  %180 = vperm.xlu0 %179, %v15
  %v181 = vpop.permute.xlu0 %180
  %v183 = vadd.f32 %v177, %v181
  %184 = vst [vmem:[%s2] sm:$0x1] %v183
  // Predicated region
  $region10: #{critic_forward.1} parent=0 // pred_check
    _
  $region11: #{critic_forward.1} parent=0 // pred_check_branch
    %186 = sbr.rel (0) target = $region13
  $region12: #{critic_forward.1} parent=0 // pred_region
    _
  $region13: #{critic_forward.1} parent=0 // pred_fallthru
    _
  // Predicated region
  $region14: #{critic_forward.1} parent=0 // pred_check
    _
  $region15: #{critic_forward.1} parent=0 // pred_check_branch
    %188 = sbr.rel (0) target = $region17
  $region16: #{critic_forward.1} parent=0 // pred_region
    _
  $region17: #{critic_forward.1} parent=0 // pred_fallthru
    _

</llo_original>
